<compile_context>
chip_gen: v6e
topology: v6e:2x2x1
jax: 0.10.0
libtpu: 0.0.40
codegen_flags: <defaults>
</compile_context>

<pallas_src>
import functools

import jax
import jax.numpy as jnp
from jax import lax
from jax.experimental import pallas as pl
from jax.experimental.pallas import tpu as pltpu

_LANE = 128
_FOLD = 1024                 # optional free re-fold width (multiple of 128 and 4)
_MAX_TILE_ROWS = 512         # multiple of 8
_MAX_BLOCK_BYTES = 2 << 20   # per-buffer VMEM budget (sublane-padded estimate)


def _clip_kernel(boxes_ref, out_ref, *, w, h):
    b = boxes_ref[...]
    dt = b.dtype
    zero = jnp.asarray(0, dt)
    x_max = jnp.asarray(w - 1, dt)
    y_max = jnp.asarray(h - 1, dt)
    # Alternating [x_max, y_max, x_max, y_max, ...] bound built once per block
    # as a single (1, tile_c) row and broadcast over the sublane dim.  Block
    # column offsets are multiples of 4, so lane parity == coordinate parity.
    lane = lax.broadcasted_iota(jnp.int32, (1, b.shape[1]), dimension=1)
    max_row = jnp.where((lane & 1) == 0, x_max, y_max)
    out_ref[...] = jnp.minimum(jnp.maximum(b, zero), max_row)


def _round_up(x, m):
    return -(-x // m) * m


def clip_boxes(batch_imgs, batch_boxes):
    """Pallas TPU implementation of ClipBoxes.forward (functional, not in-place)."""
    B, N, four = batch_boxes.shape
    assert four == 4, "boxes must have last dim 4"
    h, w = batch_imgs.shape[2], batch_imgs.shape[3]
    dtype = batch_boxes.dtype
    itemsize = jnp.dtype(dtype).itemsize

    # Free, contiguous reshape to a lane-oriented 2-D slab (no data movement).
    R, C = B, N * 4
    slab = batch_boxes.reshape(R, C)

    # Optional free re-fold: when the batch dim is tiny but the columns split
    # evenly into lane-dense chunks, fold columns into rows so vregs use all 8
    # sublanes.  Row starts stay multiples of 4 -> parity trick still holds.
    if R < 8 and C % _FOLD == 0 and (R * C) // _FOLD >= 8:
        R, C = (R * C) // _FOLD, _FOLD
        slab = slab.reshape(R, C)

    # Row tile: full R (always legal) unless R is large, then a multiple of 8
    # with a masked tail.
    tile_r = R if R <= _MAX_TILE_ROWS else _MAX_TILE_ROWS
    grid_r = pl.cdiv(R, tile_r)

    # Column tile: a multiple of 128 lanes (or full C when C <= 128), sized to
    # (a) stay under the per-buffer VMEM budget and (b) give >= 2 grid steps
    # for the v7x megacore when the row grid alone is 1.
    if C <= _LANE:
        tile_c = C
    else:
        groups_total = pl.cdiv(C, _LANE)
        padded_rows = _round_up(tile_r, 8)
        max_groups = max(1, _MAX_BLOCK_BYTES // (padded_rows * _LANE * itemsize))
        target_groups = pl.cdiv(groups_total, 2) if grid_r == 1 else groups_total
        tile_c = _LANE * max(1, min(groups_total, max_groups, target_groups))
    grid_c = pl.cdiv(C, tile_c)

    kernel = functools.partial(_clip_kernel, w=w, h=h)
    total = B * N * 4

    out_slab = pl.pallas_call(
        kernel,
        out_shape=jax.ShapeDtypeStruct((R, C), dtype),
        grid=(grid_r, grid_c),
        in_specs=[pl.BlockSpec((tile_r, tile_c), lambda i, j: (i, j))],
        out_specs=pl.BlockSpec((tile_r, tile_c), lambda i, j: (i, j)),
        input_output_aliases={0: 0},
        compiler_params=pltpu.CompilerParams(
            dimension_semantics=("parallel", "parallel")),
        cost_estimate=pl.CostEstimate(
            flops=2 * total,
            transcendentals=0,
            bytes_accessed=2 * total * itemsize),
    )(slab)

    # Free contiguous reshape back to (B, N, 4) — no slicing, no copies.
    return out_slab.reshape(B, N, 4)


if __name__ == "__main__":
    key = jax.random.PRNGKey(0)
    k_img, k_box = jax.random.split(key)

    B, Cc, H, W = 2, 3, 16, 16
    N = 16  # boxes per image

    batch_imgs = jax.random.normal(k_img, (B, Cc, H, W), dtype=jnp.float32)
    # Boxes spanning a range that exceeds the image bounds on both sides so
    # every clamp branch is exercised.
    batch_boxes = jax.random.uniform(
        k_box, (B, N, 4), dtype=jnp.float32, minval=-8.0, maxval=24.0)

    # Pure-JAX reference (computed before the kernel call since the kernel
    # declares input/output aliasing).
    ref = jnp.maximum(batch_boxes, 0.0)
    max_vals = jnp.array([W - 1, H - 1, W - 1, H - 1], dtype=jnp.float32)
    ref = jnp.minimum(ref, max_vals)

    out = jax.block_until_ready(clip_boxes(batch_imgs, batch_boxes))

    assert out.shape == batch_boxes.shape
    assert out.dtype == batch_boxes.dtype
    assert jnp.allclose(out, ref), "mismatch vs reference"

    print("KERNEL_OK")
</pallas_src>

<mosaic_0001>
module attributes {stable_mosaic.version = 11 : i64} {
  func.func @_clip_kernel(%arg0: i32, %arg1: i32, %arg2: memref<2x64xf32, #tpu.memory_space<vmem>>, %arg3: memref<2x64xf32, #tpu.memory_space<vmem>>) attributes {dimension_semantics = [#tpu.dimension_semantics<parallel>, #tpu.dimension_semantics<parallel>], iteration_bounds = array<i64: 1, 1>, scalar_prefetch = 0 : i64, scratch_operands = 0 : i64, tpu.core_type = #tpu.core_type<tc>, window_params = [{transform_indices = @transform_0, window_bounds = array<i64: 2, 64>}, {transform_indices = @transform_1, window_bounds = array<i64: 2, 64>}]} {
    %c0 = arith.constant 0 : index
    %c0_0 = arith.constant 0 : index
    %0 = vector.load %arg2[%c0, %c0_0] : memref<2x64xf32, #tpu.memory_space<vmem>>, vector<2x64xf32>
    %1 = tpu.iota {dimensions = array<i32: 1>} : vector<1x64xi32>
    %c1_i32 = arith.constant 1 : i32
    %2 = vector.broadcast %c1_i32 : i32 to vector<1x64xi32>
    %3 = arith.andi %1, %2 : vector<1x64xi32>
    %c0_i32 = arith.constant 0 : i32
    %4 = vector.broadcast %c0_i32 : i32 to vector<1x64xi32>
    %5 = arith.cmpi eq, %3, %4 : vector<1x64xi32>
    %cst = arith.constant 1.500000e+01 : f32
    %cst_1 = arith.constant 1.500000e+01 : f32
    %6 = vector.broadcast %cst : f32 to vector<1x64xf32>
    %7 = vector.broadcast %cst_1 : f32 to vector<1x64xf32>
    %8 = arith.select %5, %6, %7 : vector<1x64xi1>, vector<1x64xf32>
    %cst_2 = arith.constant 0.000000e+00 : f32
    %9 = vector.broadcast %cst_2 : f32 to vector<2x64xf32>
    %10 = arith.maximumf %0, %9 : vector<2x64xf32>
    %11 = vector.broadcast %8 : vector<1x64xf32> to vector<2x64xf32>
    %12 = arith.minimumf %10, %11 : vector<2x64xf32>
    %c0_3 = arith.constant 0 : index
    %c0_4 = arith.constant 0 : index
    %13 = vector.load %arg3[%c0_3, %c0_4] : memref<2x64xf32, #tpu.memory_space<vmem>>, vector<2x64xf32>
    tpu.vector_store %arg3[%c0_3, %c0_4], %12 {strides = array<i32>} : memref<2x64xf32, #tpu.memory_space<vmem>>, vector<2x64xf32>,
    return
  }
  func.func @transform_0(%arg0: i32, %arg1: i32) -> (i32, i32) {
    %c0_i32 = arith.constant 0 : i32
    return %arg0, %arg1 : i32, i32
  }
  func.func @transform_1(%arg0: i32, %arg1: i32) -> (i32, i32) {
    %c0_i32 = arith.constant 0 : i32
    return %arg0, %arg1 : i32, i32
  }
}

</mosaic_0001>

<llo_original>
// kernel: tpu_custom_call.1
$region0: #{tpu_custom_call.1}
  #allocation0 [shape = 'u32[]', space=smem, size = 0x4, offset = 0x4, fixed_abs, tag = 'smem constant byte address 0x4 - core index']
  #allocation1 [shape = 'u32[144,128]{1,0:T(1,128)}', space=vmem, size = 0x12000, scoped, tag = 'internal scratch']
  %s0 = inlined_call_operand.hbm [shape: f32[2,64], index: 0, kind: input, shape index: {}, may-alias: {0,1}]
  %s1 = inlined_call_operand.hbm [shape: f32[2,64], index: 1, kind: output, shape index: {}, may-alias: {0,1}]
  %s2 = sld [smem:[#allocation0]]
  $region18: #{tpu_custom_call.1} parent=0
    _
  %s4 = ssub.s32 1, %s2
  %s5 = scalar_select 0, %s4, %s2
  $region1: #{tpu_custom_call.1} parent=0
    #allocation2 [shape = 'u8[1024]{0}', space=vmem, size = 0x400, scoped, tag = 'input window, operand 0, single buffered']
    #allocation3 [shape = 's32[1]{0}', space=sflag, size = 0x4, scoped, tag = 'scoped memory for tpu_custom_call.1']
    #allocation4 [shape = 's32[1]{0}', space=sflag, size = 0x4, scoped, tag = 'scoped memory for tpu_custom_call.1']
    #allocation5 [shape = 'u8[1024]{0}', space=vmem, size = 0x400, scoped, tag = 'output window, operand 0, single buffered']
    %6 = vsyncpa [#allocation3], 0
    %7 = vsyncpa [#allocation4], 0
    // Predicated region
    $region2: #{tpu_custom_call.1} parent=1 // pred_check
      _
    $region3: #{tpu_custom_call.1} parent=1 // pred_check_branch
      %9 = sbr.rel (0) target = $region5
    $region4: #{tpu_custom_call.1} parent=1 // pred_region
      %s11 = ssub.s32 32, 32
      %12 = vsyncadd [#allocation3], %s11
      %s14 = sshll.u32 [#allocation2], 4
      %s15 = int_to_ptr.vmem [resolvable:$true] %s14
      %17 = dma.hbm_to_vmem [thread:$0]  %s0, 32, %s15, [#allocation3]
    $region5: #{tpu_custom_call.1} parent=1 // pred_fallthru
      _
    // Predicated region
    $region6: #{tpu_custom_call.1} parent=1 // pred_check
      _
    $region7: #{tpu_custom_call.1} parent=1 // pred_check_branch
      %19 = sbr.rel (0) target = $region9
    $region8: #{tpu_custom_call.1} parent=1 // pred_region
      %20 = dma.done [#allocation3], 32
    $region9: #{tpu_custom_call.1} parent=1 // pred_fallthru
      _
    %v21 = vld [vmem:[#allocation2] sm:$0x3]
    %v22 = vmax.f32 %v21, 0.0
    %v23 = vmin.f32 %v22, 15.0
    %vm24 = vcmask 517120
    %25 = vst.msk [vmem:[#allocation5] sm:$0x3] %vm24, %v23
    // Predicated region
    $region10: #{tpu_custom_call.1} parent=1 // pred_check
      _
    $region11: #{tpu_custom_call.1} parent=1 // pred_check_branch
      %27 = sbr.rel (0) target = $region13
    $region12: #{tpu_custom_call.1} parent=1 // pred_region
      %s29 = ssub.s32 32, 32
      %30 = vsyncadd [#allocation4], %s29
      %s32 = sshll.u32 [#allocation5], 4
      %s33 = int_to_ptr.vmem [resolvable:$true] %s32
      %35 = dma.vmem_to_hbm [thread:$0]  %s33, 32, %s1, [#allocation4]
    $region13: #{tpu_custom_call.1} parent=1 // pred_fallthru
      _
    // Predicated region
    $region14: #{tpu_custom_call.1} parent=1 // pred_check
      _
    $region15: #{tpu_custom_call.1} parent=1 // pred_check_branch
      %37 = sbr.rel (0) target = $region17
    $region16: #{tpu_custom_call.1} parent=1 // pred_region
      %38 = dma.done [#allocation4], 32
    $region17: #{tpu_custom_call.1} parent=1 // pred_fallthru
      _
    %39 = vsyncpa [#allocation3], 1
    %40 = vsyncpa [#allocation4], 1

</llo_original>
